<compile_context>
chip_gen: v7x
topology: tpu7x:2x2x1
jax: 0.10.0
libtpu: 0.0.40
codegen_flags: <defaults>
</compile_context>

<pallas_src>
import numpy as np
import jax
import jax.numpy as jnp
from jax import lax
from jax.experimental import pallas as pl
from jax.experimental.pallas import tpu as pltpu


def _round_up(x, m):
    return ((x + m - 1) // m) * m


def _fused_embedding_bag_kernel(tile_table_ref, tile_start_ref,   # scalar prefetch (SMEM)
                                idx_ref, w_ref,                   # inputs (VMEM)
                                out_ref,                          # output (VMEM)
                                acc_ref):                         # scratch (VMEM)
    """One grid step == one R_TILE-row tile of one embedding table.

    tile_table_ref : SMEM [num_tiles]  table id owning tile i (used by index_maps)
    tile_start_ref : SMEM [num_tiles]  local row offset of tile i inside its table
    idx_ref        : VMEM [B, MB]      int32 bag indices of that table, -1 = pad
    w_ref          : VMEM [R_TILE, D]  weight rows of this tile (zero padded)
    out_ref        : VMEM [B, D]       per-table bag sums
    acc_ref        : VMEM [B, D] f32   accumulator across the table's row tiles
    """
    i = pl.program_id(0)
    row_start = tile_start_ref[i]          # == 0 exactly on the first tile of a table

    @pl.when(row_start == 0)
    def _init():
        acc_ref[...] = jnp.zeros_like(acc_ref)

    idx = idx_ref[...]                     # (B, MB) int32, -1 marks padded bag slots
    b, mb = idx.shape
    r_tile = w_ref.shape[0]

    # counts[b, r] = #occurrences of local row (row_start + r) in bag b.
    # Built from vector compares against a row-id iota: no scalar-indexed
    # gathers, no dependent-load chain.  Accumulate in int32, convert once.
    row_ids = row_start + lax.broadcasted_iota(jnp.int32, (b, r_tile), 1)
    counts = jnp.zeros((b, r_tile), jnp.int32)
    for m in range(mb):                    # static & tiny -> unrolled VPU adds
        counts = counts + (idx[:, m:m + 1] == row_ids).astype(jnp.int32)

    # Bag sum for this row tile == counts @ W_tile on the MXU.  Exact f32 path
    # for f32 tables; bf16 tables get the native bf16 MXU (counts cast exactly).
    prec = (jax.lax.Precision.HIGHEST
            if w_ref.dtype == jnp.float32 else jax.lax.Precision.DEFAULT)
    acc_ref[...] += jnp.dot(counts.astype(w_ref.dtype), w_ref[...],
                            preferred_element_type=jnp.float32,
                            precision=prec)

    # Lane-dense (B, D) store; HBM writeback happens only when the output
    # block index (table id) changes, so this per-step write is VMEM-only.
    out_ref[...] = acc_ref[...].astype(out_ref.dtype)


@jax.jit
def _fused_embedding_bag_call(tile_table, tile_start, idx_stacked, w_cat):
    num_tiles = tile_table.shape[0]
    num_tables, b, mb = idx_stacked.shape
    r_tile = w_cat.shape[0] // num_tiles
    d = w_cat.shape[1]

    grid_spec = pltpu.PrefetchScalarGridSpec(
        num_scalar_prefetch=2,
        grid=(num_tiles,),
        in_specs=[
            # Per-table dense bag indices; block picked by the tile's table id.
            pl.BlockSpec((None, b, mb), lambda i, tt, ts: (tt[i], 0, 0)),
            # Streaming weight row tiles of the ragged concatenation.
            pl.BlockSpec((r_tile, d), lambda i, tt, ts: (i, 0)),
        ],
        out_specs=pl.BlockSpec((None, b, d), lambda i, tt, ts: (tt[i], 0, 0)),
        scratch_shapes=[pltpu.VMEM((b, d), jnp.float32)],
    )

    return pl.pallas_call(
        _fused_embedding_bag_kernel,
        out_shape=jax.ShapeDtypeStruct((num_tables, b, d), w_cat.dtype),
        grid_spec=grid_spec,
        compiler_params=pltpu.CompilerParams(
            # Row tiles of one table accumulate into the same output block, so
            # the single grid axis is a reduction axis.
            # TODO(synk): on v7x (2 TCs) add a parallel axis over D / batch
            # tiles to balance work across both TensorCores.
            dimension_semantics=("arbitrary",),
            # Far above actual use (~2*R_TILE*D*4 + tiny buffers); safe on
            # every generation (<= scoped default on v6e/v7x, << physical).
            vmem_limit_bytes=32 * 1024 * 1024,
        ),
    )(tile_table, tile_start, idx_stacked, w_cat)


def _dense_bag_indices(indices, offsets, batch, max_bag):
    """Flat (indices, offsets) -> dense [batch, max_bag] int32, -1 padded."""
    total = int(indices.shape[0])
    if total == 0:                          # empty-table guard
        return jnp.full((batch, max_bag), -1, dtype=jnp.int32)
    off = jnp.asarray(offsets, jnp.int32)
    ends = jnp.concatenate([off[1:], jnp.array([total], jnp.int32)])
    lengths = ends - off
    slot = jnp.arange(max_bag, dtype=jnp.int32)[None, :]
    pos = off[:, None] + slot
    valid = slot < lengths[:, None]
    pos_c = jnp.clip(pos, 0, total - 1)
    gathered = jnp.asarray(indices, jnp.int32)[pos_c]
    return jnp.where(valid, gathered, jnp.int32(-1))


def embedding_bag_list_forward(weights, indices_list, offsets_list, *, batch,
                               r_tile_max=1024):
    """Mirrors EmbeddingBagList.forward: returns a list of [batch, D] bag sums.

    Host-side prep requires concrete (non-traced) offsets that are
    non-decreasing with offsets[0] == 0, exactly like torch EmbeddingBag.
    """
    num_tables = len(weights)
    d = int(weights[0].shape[1])
    assert all(int(w.shape[1]) == d for w in weights), "all tables must share D"

    rows = [int(w.shape[0]) for w in weights]

    # Largest bag size across all tables (for the dense [batch, MB] layout).
    max_bag = 1
    for idx, off in zip(indices_list, offsets_list):
        off_np = np.asarray(off)
        assert off_np.ndim == 1 and off_np.shape[0] == batch, "offsets must have length batch"
        assert int(off_np[0]) == 0, "offsets[0] must be 0"
        assert np.all(np.diff(off_np) >= 0), "offsets must be non-decreasing"
        lengths = np.diff(off_np, append=int(idx.shape[0]))
        assert np.all(lengths >= 0), "indices shorter than last offset"
        if lengths.size:
            max_bag = max(max_bag, int(lengths.max()))

    # Row-tile size: multiple of 8 (sublane), capped for VMEM, and never larger
    # than the largest table so small tables are padded per-table, not to a
    # global maximum.
    r_tile = min(r_tile_max, _round_up(max(rows), 8))

    # Ragged concatenation of tables along the row axis + per-tile metadata.
    w_parts, tile_table, tile_start = [], [], []
    for t, w in enumerate(weights):
        n_tiles = max(1, -(-rows[t] // r_tile))          # cdiv
        padded = n_tiles * r_tile
        w_parts.append(jnp.pad(jnp.asarray(w), ((0, padded - rows[t]), (0, 0))))
        tile_table.extend([t] * n_tiles)
        tile_start.extend(range(0, padded, r_tile))
    w_cat = jnp.concatenate(w_parts, axis=0)             # [sum(padded_rows), D]
    tile_table = jnp.asarray(tile_table, jnp.int32)      # [num_tiles]
    tile_start = jnp.asarray(tile_start, jnp.int32)      # [num_tiles]

    # Dense per-bag indices, -1 = padding (never matches any row id).
    idx_stacked = jnp.stack([
        _dense_bag_indices(idx, off, batch, max_bag)
        for idx, off in zip(indices_list, offsets_list)
    ])                                                   # [T, batch, MB]

    out = _fused_embedding_bag_call(tile_table, tile_start, idx_stacked, w_cat)
    return [out[k] for k in range(num_tables)]


if __name__ == "__main__":
    key = jax.random.PRNGKey(0)

    # Small deterministic setup consistent with EmbeddingBagList(max_rows, D).
    max_rows = [40, 24, 56]          # rows per embedding table
    vector_size = 128                # D (lane-friendly)
    batch = 8                        # bags per table
    bag_sizes = [3, 2, 4]            # indices per bag, per table

    weights, indices_list, offsets_list = [], [], []
    for n_rows, bs in zip(max_rows, bag_sizes):
        key, kw, ki = jax.random.split(key, 3)
        w = jax.random.normal(kw, (n_rows, vector_size), dtype=jnp.float32)
        idx = jax.random.randint(ki, (batch * bs,), 0, n_rows, dtype=jnp.int32)
        off = jnp.arange(batch, dtype=jnp.int32) * bs
        weights.append(w)
        indices_list.append(idx)
        offsets_list.append(off)

    outs = embedding_bag_list_forward(
        weights, indices_list, offsets_list, batch=batch)
    outs = [jax.block_until_ready(o) for o in outs]

    # Pure-JAX reference (gather + per-bag sum) against the unpadded tables.
    ok = True
    for out, w, idx, bs in zip(outs, weights, indices_list, bag_sizes):
        ref = w[idx].reshape(batch, bs, vector_size).sum(axis=1)
        ok = ok and bool(jnp.allclose(out, ref, atol=1e-5, rtol=1e-5))

    print("KERNEL_OK" if ok else "KERNEL_MISMATCH")
</pallas_src>

<mosaic_0001>
module attributes {stable_mosaic.version = 11 : i64} {
  func.func @_fused_embedding_bag_kernel(%arg0: i32, %arg1: memref<3xi32, #tpu.memory_space<smem>>, %arg2: memref<3xi32, #tpu.memory_space<smem>>, %arg3: memref<1x8x4xi32, #tpu.memory_space<vmem>>, %arg4: memref<56x128xf32, #tpu.memory_space<vmem>>, %arg5: memref<1x8x128xf32, #tpu.memory_space<vmem>>, %arg6: memref<8x128xf32, #tpu.memory_space<vmem>>) attributes {dimension_semantics = [#tpu.dimension_semantics<arbitrary>], iteration_bounds = array<i64: 3>, scalar_prefetch = 2 : i64, scratch_operands = 1 : i64, tpu.core_type = #tpu.core_type<tc>, window_params = [{transform_indices = @transform_0, window_bounds = array<i64: 1, 8, 4>}, {transform_indices = @transform_1, window_bounds = array<i64: 56, 128>}, {transform_indices = @transform_2, window_bounds = array<i64: 1, 8, 128>}]} {
    %0 = arith.index_cast %arg0 : i32 to index
    %1 = memref.load %arg2[%0] : memref<3xi32, #tpu.memory_space<smem>>
    %c0_i32 = arith.constant 0 : i32
    %2 = arith.cmpi eq, %1, %c0_i32 : i32
    %3 = arith.extui %2 : i1 to i32
    %c0_i32_0 = arith.constant 0 : i32
    %4 = arith.cmpi ne, %3, %c0_i32_0 : i32
    scf.if %4 {
      %cst_15 = arith.constant 0.000000e+00 : f32
      %41 = vector.broadcast %cst_15 : f32 to vector<8x128xf32>
      %c0_16 = arith.constant 0 : index
      %c0_17 = arith.constant 0 : index
      %42 = vector.load %arg6[%c0_16, %c0_17] : memref<8x128xf32, #tpu.memory_space<vmem>>, vector<8x128xf32>
      tpu.vector_store %arg6[%c0_16, %c0_17], %41 {strides = array<i32>} : memref<8x128xf32, #tpu.memory_space<vmem>>, vector<8x128xf32>,
    } else {
    }
    %c0 = arith.constant 0 : index
    %c0_1 = arith.constant 0 : index
    %c0_2 = arith.constant 0 : index
    %5 = vector.load %arg3[%c0, %c0_1, %c0_2] : memref<1x8x4xi32, #tpu.memory_space<vmem>>, vector<1x8x4xi32>
    %6 = vector.shape_cast %5 : vector<1x8x4xi32> to vector<8x4xi32>
    %7 = tpu.iota {dimensions = array<i32: 1>} : vector<8x56xi32>
    %8 = vector.broadcast %1 : i32 to vector<8x56xi32>
    %9 = arith.addi %8, %7 : vector<8x56xi32>
    %c0_i32_3 = arith.constant 0 : i32
    %10 = vector.broadcast %c0_i32_3 : i32 to vector<8x56xi32>
    %11 = vector.extract_strided_slice %6 {offsets = [0, 0], sizes = [8, 1], strides = [1, 1]} : vector<8x4xi32> to vector<8x1xi32>
    %12 = vector.broadcast %11 : vector<8x1xi32> to vector<8x56xi32>
    %13 = arith.cmpi eq, %12, %9 : vector<8x56xi32>
    %14 = arith.extui %13 : vector<8x56xi1> to vector<8x56xi32>
    %15 = arith.addi %10, %14 : vector<8x56xi32>
    %16 = vector.extract_strided_slice %6 {offsets = [0, 1], sizes = [8, 1], strides = [1, 1]} : vector<8x4xi32> to vector<8x1xi32>
    %17 = vector.broadcast %16 : vector<8x1xi32> to vector<8x56xi32>
    %18 = arith.cmpi eq, %17, %9 : vector<8x56xi32>
    %19 = arith.extui %18 : vector<8x56xi1> to vector<8x56xi32>
    %20 = arith.addi %15, %19 : vector<8x56xi32>
    %21 = vector.extract_strided_slice %6 {offsets = [0, 2], sizes = [8, 1], strides = [1, 1]} : vector<8x4xi32> to vector<8x1xi32>
    %22 = vector.broadcast %21 : vector<8x1xi32> to vector<8x56xi32>
    %23 = arith.cmpi eq, %22, %9 : vector<8x56xi32>
    %24 = arith.extui %23 : vector<8x56xi1> to vector<8x56xi32>
    %25 = arith.addi %20, %24 : vector<8x56xi32>
    %26 = vector.extract_strided_slice %6 {offsets = [0, 3], sizes = [8, 1], strides = [1, 1]} : vector<8x4xi32> to vector<8x1xi32>
    %27 = vector.broadcast %26 : vector<8x1xi32> to vector<8x56xi32>
    %28 = arith.cmpi eq, %27, %9 : vector<8x56xi32>
    %29 = arith.extui %28 : vector<8x56xi1> to vector<8x56xi32>
    %30 = arith.addi %25, %29 : vector<8x56xi32>
    %c0_4 = arith.constant 0 : index
    %c0_5 = arith.constant 0 : index
    %31 = vector.load %arg6[%c0_4, %c0_5] : memref<8x128xf32, #tpu.memory_space<vmem>>, vector<8x128xf32>
    %32 = arith.sitofp %30 : vector<8x56xi32> to vector<8x56xf32>
    %c0_6 = arith.constant 0 : index
    %c0_7 = arith.constant 0 : index
    %33 = vector.load %arg4[%c0_6, %c0_7] : memref<56x128xf32, #tpu.memory_space<vmem>>, vector<56x128xf32>
    %cst = arith.constant dense<0.000000e+00> : vector<8x128xf32>
    %34 = tpu.matmul %32, %33, %cst {dimension_numbers = #tpu.dot_dimension_numbers<[1], [0], [0], [1], [0, 0, 1, 1], [], []>, precision = #tpu.contract_precision<fp32>} : vector<8x56xf32>, vector<56x128xf32>, vector<8x128xf32> -> vector<8x128xf32>
    %35 = arith.addf %31, %34 : vector<8x128xf32>
    %c0_8 = arith.constant 0 : index
    %c0_9 = arith.constant 0 : index
    %36 = vector.load %arg6[%c0_8, %c0_9] : memref<8x128xf32, #tpu.memory_space<vmem>>, vector<8x128xf32>
    tpu.vector_store %arg6[%c0_8, %c0_9], %35 {strides = array<i32>} : memref<8x128xf32, #tpu.memory_space<vmem>>, vector<8x128xf32>,
    %c0_10 = arith.constant 0 : index
    %c0_11 = arith.constant 0 : index
    %37 = vector.load %arg6[%c0_10, %c0_11] : memref<8x128xf32, #tpu.memory_space<vmem>>, vector<8x128xf32>
    %c0_12 = arith.constant 0 : index
    %c0_13 = arith.constant 0 : index
    %c0_14 = arith.constant 0 : index
    %38 = vector.load %arg5[%c0_12, %c0_13, %c0_14] : memref<1x8x128xf32, #tpu.memory_space<vmem>>, vector<1x8x128xf32>
    %39 = vector.shape_cast %38 : vector<1x8x128xf32> to vector<8x128xf32>
    %40 = vector.shape_cast %37 : vector<8x128xf32> to vector<1x8x128xf32>
    tpu.vector_store %arg5[%c0_12, %c0_13, %c0_14], %40 {strides = array<i32>} : memref<1x8x128xf32, #tpu.memory_space<vmem>>, vector<1x8x128xf32>,
    return
  }
  func.func @transform_0(%arg0: i32, %arg1: memref<3xi32, #tpu.memory_space<smem>>, %arg2: memref<3xi32, #tpu.memory_space<smem>>) -> (i32, i32, i32) {
    %0 = arith.index_cast %arg0 : i32 to index
    %1 = memref.load %arg1[%0] : memref<3xi32, #tpu.memory_space<smem>>
    %c0_i32 = arith.constant 0 : i32
    %c0_i32_0 = arith.constant 0 : i32
    %c0_i32_1 = arith.constant 0 : i32
    return %1, %c0_i32, %c0_i32_0 : i32, i32, i32
  }
  func.func @transform_1(%arg0: i32, %arg1: memref<3xi32, #tpu.memory_space<smem>>, %arg2: memref<3xi32, #tpu.memory_space<smem>>) -> (i32, i32) {
    %c0_i32 = arith.constant 0 : i32
    %c0_i32_0 = arith.constant 0 : i32
    return %arg0, %c0_i32 : i32, i32
  }
  func.func @transform_2(%arg0: i32, %arg1: memref<3xi32, #tpu.memory_space<smem>>, %arg2: memref<3xi32, #tpu.memory_space<smem>>) -> (i32, i32, i32) {
    %0 = arith.index_cast %arg0 : i32 to index
    %1 = memref.load %arg1[%0] : memref<3xi32, #tpu.memory_space<smem>>
    %c0_i32 = arith.constant 0 : i32
    %c0_i32_0 = arith.constant 0 : i32
    %c0_i32_1 = arith.constant 0 : i32
    return %1, %c0_i32, %c0_i32_0 : i32, i32, i32
  }
}

</mosaic_0001>

<llo_original>
// kernel: _fused_embedding_bag_call.1
$region0: #{_fused_embedding_bag_call.1}
  #allocation0 [shape = 'u32[]', space=smem, size = 0x4, offset = 0x4, fixed_abs, tag = 'smem constant byte address 0x4 - core index']
  #allocation1 [shape = 'u32[144,128]{1,0:T(1,128)}', space=vmem, size = 0x12000, scoped, tag = 'internal scratch']
  #allocation2 [shape = 'f32[8,128]{1,0:T(8,128)}', space=vmem, size = 0x1000, scoped, tag = 'scratch operand']
  #allocation3 [shape = 's32[1]{0}', space=sflag, size = 0x4, scoped, tag = 'scoped memory for _fused_embedding_bag_call.1']
  #allocation4 [shape = 'u8[512]{0}', space=smem, size = 0x200, scoped, tag = 'prefetched SMEM operand 0']
  #allocation5 [shape = 'u8[512]{0}', space=smem, size = 0x200, scoped, tag = 'prefetched SMEM operand 1']
  %s0 = inlined_call_operand.vmem [shape: s32[3], index: 0, kind: input, shape index: {}]
  %s1 = inlined_call_operand.vmem [shape: s32[3], index: 1, kind: input, shape index: {}]
  %s2 = inlined_call_operand.vmem [shape: s32[3,8,4], index: 2, kind: input, shape index: {}]
  %s3 = inlined_call_operand.hbm [shape: f32[168,128], index: 3, kind: input, shape index: {}]
  %s4 = inlined_call_operand.hbm [shape: f32[3,8,128], index: 4, kind: output, shape index: {}]
  %s5 = sld [smem:[#allocation0]]
  $region49: #{_fused_embedding_bag_call.1} parent=0
    _
  %s7 = ssub.s32 1, %s5
  %s8 = scalar_select 0, %s7, %s5
  %s9 = sshll.u32 %s0, 4
  %s10 = int_to_ptr.vmem [resolvable:$true] %s9
  %12 = dma.vmem_to_smem %s10, 16, [#allocation4], [#allocation3]
  %s13 = sshll.u32 %s1, 4
  %s14 = int_to_ptr.vmem [resolvable:$true] %s13
  %16 = dma.vmem_to_smem %s14, 16, [#allocation5], [#allocation3]
  %17 = dma.done [#allocation3], 32
  %18 = sfence
  $region1: #{_fused_embedding_bag_call.1} parent=0
    #allocation6 [shape = 'u8[57344]{0}', space=vmem, size = 0xe000, scoped, tag = 'input window, operand 3']
    #allocation7 [shape = 's32[2]{0}', space=sflag, size = 0x8, scoped, tag = 'scoped memory for _fused_embedding_bag_call.1']
    #allocation8 [shape = 's32[2]{0}', space=sflag, size = 0x8, scoped, tag = 'scoped memory for _fused_embedding_bag_call.1']
    #allocation9 [shape = 'u8[8192]{0}', space=vmem, size = 0x2000, scoped, tag = 'output window, operand 0']
    %19 = vsyncpa [#allocation7], 0
    %s20 = scalar_lea.sflag [#allocation7], 1
    %21 = vsyncpa %s20, 0
    %22 = vsyncpa [#allocation8], 0
    %s23 = scalar_lea.sflag [#allocation8], 1
    %24 = vsyncpa %s23, 0
    loop: start=0, step=1, limit=5
    $region2: #{_fused_embedding_bag_call.1} parent=1 // loop_pre_header
      _
    $region3: #{_fused_embedding_bag_call.1} parent=1 // loop_header
      %s26 = sphi 0, %s30
      %p27 = scmp.ge.s32.totalorder %s26, 5
      %s38 = sphi 0, %s40
      %s41 = sphi 0, %s38
      %s42 = sphi 0, %s41
      %s58 = sphi 0, %s42
      %s64 = sphi 0, %s66
      %s67 = sphi 0, %s64
      %s68 = sphi 0, %s67
      %s84 = sphi 0, %s68
      %s92 = sphi 0, %s94
      %s95 = sphi 0, %s92
      %s96 = sphi 0, %s95
      %s112 = sphi 0, %s96
    $region4: #{_fused_embedding_bag_call.1} parent=1 // loop_header_branch
      %29 = sbr.rel (%p27) target = $region8
    $region5: #{_fused_embedding_bag_call.1} parent=1 // loop_body
      %s31 = ssub.s32 %s26, 1
      %s32 = ssub.s32 %s26, 2
      %s33 = sadd.s32 %s26, 1
      %s34 = sld [smem:[#allocation4 + %s26]]
      %s35 = sld [smem:[#allocation4 + %s33]]
      %s36 = ssub.s32 %s34, %s35
      %p37 = scmp.eq.s32.totalorder %s36, 0
      %s39 = sadd.s32 %s38, 1
      %s40 = scalar_select %p37, %s38, %s39
      %p43 = pneg %p37
      %p44 = scmp.eq.s32.totalorder %s26, 2
      %p45 = por %p43, %p44
      %p46 = scmp.ne.s32.totalorder %s38, %s41
      %p47 = scmp.eq.s32.totalorder %s26, 0
      %p48 = por %p46, %p47
      %p49 = scmp.ne.s32.totalorder %s38, %s41
      %p50 = scmp.eq.s32.totalorder %s31, 2
      %p51 = por %p49, %p50
      %p52 = scmp.ne.s32.totalorder %s41, %s42
      %p53 = scmp.eq.s32.totalorder %s31, 0
      %p54 = por %p52, %p53
      %p55 = scmp.ne.s32.totalorder %s41, %s42
      %p56 = scmp.eq.s32.totalorder %s32, 2
      %p57 = por %p55, %p56
      %p59 = scmp.ne.s32.totalorder %s42, %s58
      %p60 = scmp.eq.s32.totalorder %s32, 0
      %p61 = por %p59, %p60
      %s62 = ssub.s32 %s26, %s33
      %p63 = scmp.eq.s32.totalorder %s62, 0
      %s65 = sadd.s32 %s64, 1
      %s66 = scalar_select %p63, %s64, %s65
      %p69 = pneg %p63
      %p70 = scmp.eq.s32.totalorder %s26, 2
      %p71 = por %p69, %p70
      %p72 = scmp.ne.s32.totalorder %s64, %s67
      %p73 = scmp.eq.s32.totalorder %s26, 0
      %p74 = por %p72, %p73
      %p75 = scmp.ne.s32.totalorder %s64, %s67
      %p76 = scmp.eq.s32.totalorder %s31, 2
      %p77 = por %p75, %p76
      %p78 = scmp.ne.s32.totalorder %s67, %s68
      %p79 = scmp.eq.s32.totalorder %s31, 0
      %p80 = por %p78, %p79
      %p81 = scmp.ne.s32.totalorder %s67, %s68
      %p82 = scmp.eq.s32.totalorder %s32, 2
      %p83 = por %p81, %p82
      %p85 = scmp.ne.s32.totalorder %s68, %s84
      %p86 = scmp.eq.s32.totalorder %s32, 0
      %p87 = por %p85, %p86
      %s88 = sld [smem:[#allocation4 + %s26]]
      %s89 = sld [smem:[#allocation4 + %s33]]
      %s90 = ssub.s32 %s88, %s89
      %p91 = scmp.eq.s32.totalorder %s90, 0
      %s93 = sadd.s32 %s92, 1
      %s94 = scalar_select %p91, %s92, %s93
      %p97 = pneg %p91
      %p98 = scmp.eq.s32.totalorder %s26, 2
      %p99 = por %p97, %p98
      %p100 = scmp.ne.s32.totalorder %s92, %s95
      %p101 = scmp.eq.s32.totalorder %s26, 0
      %p102 = por %p100, %p101
      %p103 = scmp.ne.s32.totalorder %s92, %s95
      %p104 = scmp.eq.s32.totalorder %s31, 2
      %p105 = por %p103, %p104
      %p106 = scmp.ne.s32.totalorder %s95, %s96
      %p107 = scmp.eq.s32.totalorder %s31, 0
      %p108 = por %p106, %p107
      %p109 = scmp.ne.s32.totalorder %s95, %s96
      %p110 = scmp.eq.s32.totalorder %s32, 2
      %p111 = por %p109, %p110
      %p113 = scmp.ne.s32.totalorder %s96, %s112
      %p114 = scmp.eq.s32.totalorder %s32, 0
      %p115 = por %p113, %p114
      %p116 = scmp.le.s32.totalorder 1, %s26
      %p117 = scmp.lt.s32.totalorder %s26, 4
      %p118 = pnand %p116, %p117
      %p119 = pneg %p118
      // Predicated region
      $region9: #{_fused_embedding_bag_call.1} parent=5 // pred_check
        _
      $region10: #{_fused_embedding_bag_call.1} parent=5 // pred_check_branch
        %121 = sbr.rel (%p118) target = $region12
      $region11: #{_fused_embedding_bag_call.1} parent=5 // pred_region
        %s122 = ssub.s32 %s26, 1
      $region12: #{_fused_embedding_bag_call.1} parent=5 // pred_fallthru
        _
      %p123 = scmp.lt.s32.totalorder %s26, 3
      // Predicated region
      $region13: #{_fused_embedding_bag_call.1} parent=5 // pred_check
        %p124 = pneg %p123
      $region14: #{_fused_embedding_bag_call.1} parent=5 // pred_check_branch
        %126 = sbr.rel (%p124) target = $region16
      $region15: #{_fused_embedding_bag_call.1} parent=5 // pred_region
        // Predicated region
        $region17: #{_fused_embedding_bag_call.1} parent=15 // pred_check
          %p127 = pneg %p48
        $region18: #{_fused_embedding_bag_call.1} parent=15 // pred_check_branch
          %129 = sbr.rel (%p127) target = $region20
        $region19: #{_fused_embedding_bag_call.1} parent=15 // pred_region
          %s130 = sld [smem:[#allocation4 + %s26]]
          %p131 = scmp.lt.s32.totalorder %s130, 2
          %s132 = scalar_select %p131, %s130, 2
          %s133 = smul.addr %s132, 8
          %s134 = scalar_lea.vmem %s2, %s133
          %s135 = sld [smem:[#allocation4 + %s26]]
        $region20: #{_fused_embedding_bag_call.1} parent=15 // pred_fallthru
          _
        // Predicated region
        $region21: #{_fused_embedding_bag_call.1} parent=15 // pred_check
          %p136 = pneg %p74
        $region22: #{_fused_embedding_bag_call.1} parent=15 // pred_check_branch
          %138 = sbr.rel (%p136) target = $region24
        $region23: #{_fused_embedding_bag_call.1} parent=15 // pred_region
          %s139 = sand.u32 %s64, 1
          %s140 = scalar_lea.sflag [#allocation7], %s139
          %s141 = sand.u32 %s64, 1
          %s142 = smul.addr %s141, 56
          %s143 = scalar_lea.vmem [#allocation6], %s142
          %s144 = smul.u32 7, %s26
          %s146 = ssub.s32 896, 896
          %147 = vsyncadd %s140, %s146
          %s148 = smul.addr %s144, 128
          %s149 = scalar_lea.hbm %s3, %s148
          %s150 = sshll.u32 %s143, 4
          %s151 = int_to_ptr.vmem [resolvable:$true] %s150
          %156 = dma.hbm_to_vmem [thread:$0]  %s149, 896, %s151, %s140, 128, 128, 8
        $region24: #{_fused_embedding_bag_call.1} parent=15 // pred_fallthru
          _
      $region16: #{_fused_embedding_bag_call.1} parent=5 // pred_fallthru
        _
      %p157 = scmp.le.s32.totalorder 1, %s26
      %p158 = scmp.lt.s32.totalorder %s26, 4
      %p159 = pnand %p157, %p158
      %p160 = pneg %p159
      // Predicated region
      $region25: #{_fused_embedding_bag_call.1} parent=5 // pred_check
        _
      $region26: #{_fused_embedding_bag_call.1} parent=5 // pred_check_branch
        %162 = sbr.rel (%p159) target = $region28
      $region27: #{_fused_embedding_bag_call.1} parent=5 // pred_region
        %s163 = ssub.s32 %s26, 1
        %s164 = sand.u32 %s67, 1
        %s165 = scalar_lea.sflag [#allocation7], %s164
        %s166 = sand.u32 %s67, 1
        %s167 = smul.addr %s166, 56
        %s168 = scalar_lea.vmem [#allocation6], %s167
        // Predicated region
        $region29: #{_fused_embedding_bag_call.1} parent=27 // pred_check
          %p169 = pneg %p80
        $region30: #{_fused_embedding_bag_call.1} parent=27 // pred_check_branch
          %171 = sbr.rel (%p169) target = $region32
        $region31: #{_fused_embedding_bag_call.1} parent=27 // pred_region
          %172 = dma.done %s165, 896
        $region32: #{_fused_embedding_bag_call.1} parent=27 // pred_fallthru
          _
        %s173 = sld [smem:[#allocation4 + %s31]]
        %p174 = scmp.lt.s32.totalorder %s173, 2
        %s175 = scalar_select %p174, %s173, 2
        %s176 = smul.addr %s175, 8
        %s177 = scalar_lea.vmem %s2, %s176
        %p178 = pneg %p54
        %p179 = pneg %p51
        %s180 = sand.u32 %s67, 1
        %s181 = scalar_lea.sflag [#allocation7], %s180
        %s182 = sand.u32 %s67, 1
        %s183 = smul.addr %s182, 56
        %s184 = scalar_lea.vmem [#allocation6], %s183
        %p185 = pneg %p80
        %p186 = pneg %p77
        %p187 = pneg %p108
        %p188 = pneg %p105
        %s189 = sand.u32 %s95, 1
        %s190 = scalar_lea.sflag [#allocation8], %s189
        %s191 = sand.u32 %s95, 1
        %s192 = smul.addr %s191, 8
        %s193 = scalar_lea.vmem [#allocation9], %s192
        %s194 = sld [smem:[#allocation4 + %s31]]
        %p195 = scmp.lt.s32.totalorder %s194, 2
        %s196 = scalar_select %p195, %s194, 2
        %s197 = smul.addr %s196, 8
        %s198 = scalar_lea.vmem %s2, %s197
        %s199 = sld [smem:[#allocation4 + %s31]]
        %s200 = smul.u32 7, %s31
        %s201 = sld [smem:[#allocation4 + %s31]]
        %s202 = sld [smem:[#allocation5 + %s31]]
        %p203 = scmp.eq.s32.totalorder %s202, 0
        // Predicated region
        $region33: #{_fused_embedding_bag_call.1} parent=27 // pred_check
          %p204 = pneg %p203
        $region34: #{_fused_embedding_bag_call.1} parent=27 // pred_check_branch
          %206 = sbr.rel (%p204) target = $region36
        $region35: #{_fused_embedding_bag_call.1} parent=27 // pred_region
          %207 = vst [vmem:[#allocation2] sm:$0xff] 0.0
        $region36: #{_fused_embedding_bag_call.1} parent=27 // pred_fallthru
          _
        %v208 = vld [vmem:[%s198] sm:$0xff]
        %v209 = vlaneseq
        %v210 = vand.u32 %v209, 127
        %v211 = vstv %s202
        %v212 = vadd.s32 %v211, %v210
        %213 = vset.pattern.permute.xlu0 0
        %214 = vperm.xlu0 %213, %v208
        %v215 = vpop.permute.xlu0 %214
        %vm216 = vcmp.eq.s32.totalorder %v215, %v212
        %v217 = vsel %vm216, 1, 0
        %218 = vset.pattern.permute.xlu0 1
        %219 = vperm.xlu0 %218, %v208
        %v220 = vpop.permute.xlu0 %219
        %vm221 = vcmp.eq.s32.totalorder %v220, %v212
        %v222 = vsel %vm221, 1, 0
        %v223 = vadd.s32 %v217, %v222
        %224 = vset.pattern.permute.xlu0 2
        %225 = vperm.xlu0 %224, %v208
        %v226 = vpop.permute.xlu0 %225
        %vm227 = vcmp.eq.s32.totalorder %v226, %v212
        %v228 = vsel %vm227, 1, 0
        %v229 = vadd.s32 %v223, %v228
        %230 = vset.pattern.permute.xlu0 3
        %231 = vperm.xlu0 %230, %v208
        %v232 = vpop.permute.xlu0 %231
        %vm233 = vcmp.eq.s32.totalorder %v232, %v212
        %v234 = vsel %vm233, 1, 0
        %v235 = vadd.s32 %v229, %v234
        %v236 = vld [vmem:[#allocation2] sm:$0xff]
        %v237 = vcvt.s32.f32 %v235
        %v238 = vld [vmem:[%s168] sm:$0xff]
        %v239 = vld [vmem:[%s168 + $0x8] sm:$0xff]
        %v240 = vld [vmem:[%s168 + $0x10] sm:$0xff]
        %v241 = vld [vmem:[%s168 + $0x18] sm:$0xff]
        %v242 = vld [vmem:[%s168 + $0x20] sm:$0xff]
        %v243 = vld [vmem:[%s168 + $0x28] sm:$0xff]
        %v244 = vld [vmem:[%s168 + $0x30] sm:$0xff]
        %vm245 = vcmask 457728
        %v247 = vsel %vm245, %v237, 0
        %249 = vmatprep.subr.mxu0 0.0
        %v250 = vand.u32 %v238, 4294901760
        %251 = vmatpush1.msra.mxu0 %v250
        %252 = vmatprep.subr.mxu0 0.0
        %v253 = vand.u32 %v239, 4294901760
        %254 = vmatpush1.msra.mxu0 %v253
        %255 = vmatprep.subr.mxu0 0.0
        %v256 = vand.u32 %v240, 4294901760
        %257 = vmatpush1.msra.mxu0 %v256
        %258 = vmatprep.subr.mxu0 0.0
        %v259 = vand.u32 %v241, 4294901760
        %260 = vmatpush1.msra.mxu0 %v259
        %261 = vmatprep.subr.mxu0 0.0
        %v262 = vand.u32 %v242, 4294901760
        %263 = vmatpush1.msra.mxu0 %v262
        %264 = vmatprep.subr.mxu0 0.0
        %v265 = vand.u32 %v243, 4294901760
        %266 = vmatpush1.msra.mxu0 %v265
        %267 = vmatprep.subr.mxu0 0.0
        %v268 = vand.u32 %v244, 4294901760
        %269 = vmatpush1.msra.mxu0 %v268
        %270 = vmatprep.subr.mxu0 0.0
        %271 = vmatpush1.msra.mxu0 0.0
        %272 = vmatprep.subr.mxu0 0.0
        %273 = vmatpush1.msra.mxu0 0.0
        %274 = vmatprep.subr.mxu0 0.0
        %275 = vmatpush1.msra.mxu0 0.0
        %276 = vmatprep.subr.mxu0 0.0
        %277 = vmatpush1.msra.mxu0 0.0
        %278 = vmatprep.subr.mxu0 0.0
        %279 = vmatpush1.msra.mxu0 0.0
        %280 = vmatprep.subr.mxu0 0.0
        %281 = vmatpush1.msra.mxu0 0.0
        %282 = vmatprep.subr.mxu0 0.0
        %283 = vmatpush1.msra.mxu0 0.0
        %284 = vmatprep.subr.mxu0 0.0
        %285 = vmatpush1.msra.mxu0 0.0
        %286 = vmatprep.subr.mxu0 0.0
        %287 = vmatpush1.msra.mxu0 0.0
        %288 = vmatprep.subr.mxu0 0.0
        %289 = vmatpush1.msra.mxu0 0.0
        %290 = vmatprep.subr.mxu0 0.0
        %291 = vmatpush1.msra.mxu0 0.0
        %292 = vmatprep.subr.mxu0 0.0
        %293 = vmatpush1.msra.mxu0 0.0
        %294 = vmatprep.subr.mxu0 0.0
        %295 = vmatpush1.msra.mxu0 0.0
        %296 = vmatprep.subr.mxu0 0.0
        %297 = vmatpush1.msra.mxu0 0.0
        %298 = vmatprep.subr.mxu0 0.0
        %299 = vmatpush1.msra.mxu0 0.0
        %300 = vmatprep.subr.mxu0 0.0
        %301 = vmatpush1.msra.mxu0 0.0
        %302 = vmatprep.subr.mxu0 0.0
        %303 = vmatpush1.msra.mxu0 0.0
        %304 = vmatprep.subr.mxu0 0.0
        %305 = vmatpush1.msra.mxu0 0.0
        %306 = vmatprep.subr.mxu0 0.0
        %307 = vmatpush1.msra.mxu0 0.0
        %308 = vmatprep.subr.mxu0 0.0
        %309 = vmatpush1.msra.mxu0 0.0
        %310 = vmatprep.subr.mxu0 0.0
        %311 = vmatpush1.msra.mxu0 0.0
        %312 = vmatprep.subr.mxu0 0.0
        %313 = vmatpush1.msra.mxu0 0.0
        %314 = vmatprep.subr.mxu0 0.0
        %315 = vmatpush1.msra.mxu0 0.0
        %316 = vmatprep.subr.mxu0 0.0
        %317 = vmatpush1.msra.mxu0 0.0
        %318 = vmatprep.subr.mxu0 0.0
        %319 = vmatpush1.msra.mxu0 0.0
        %320 = vmatprep.mubr.f32.mxu0 0.0
        %v321 = vand.u32 %v247, 4294901760
        %v322 = vsub.f32 %v247, %v321
        %v323 = vand.u32 %v322, 4294901760
        %v324 = vsub.f32 %v322, %v323
        %v325 = vand.u32 %v324, 4294901760
        %326 = vmatmul.mubr.f32.gmra.mrb[0].mxu0 %v325
        %v327 = vpop.f32.mrb[0].mxu0
        %v328 = vadd.f32 0.0, %v327
        %v329 = vpop.f32.mrb[0].mxu0
        %330 = vdwg.mxu0
        %331 = vmatprep.subr.mxu0 0.0
        %v332 = vand.u32 %v238, 4294901760
        %v333 = vsub.f32 %v238, %v332
        %v334 = vand.u32 %v333, 4294901760
        %v335 = vsub.f32 %v333, %v334
        %v336 = vand.u32 %v335, 4294901760
        %337 = vmatpush1.msra.mxu0 %v336
        %338 = vmatprep.subr.mxu0 0.0
        %v339 = vand.u32 %v239, 4294901760
        %v340 = vsub.f32 %v239, %v339
        %v341 = vand.u32 %v340, 4294901760
        %v342 = vsub.f32 %v340, %v341
        %v343 = vand.u32 %v342, 4294901760
        %344 = vmatpush1.msra.mxu0 %v343
        %345 = vmatprep.subr.mxu0 0.0
        %v346 = vand.u32 %v240, 4294901760
        %v347 = vsub.f32 %v240, %v346
        %v348 = vand.u32 %v347, 4294901760
        %v349 = vsub.f32 %v347, %v348
        %v350 = vand.u32 %v349, 4294901760
        %351 = vmatpush1.msra.mxu0 %v350
        %352 = vmatprep.subr.mxu0 0.0
        %v353 = vand.u32 %v241, 4294901760
        %v354 = vsub.f32 %v241, %v353
        %v355 = vand.u32 %v354, 4294901760
        %v356 = vsub.f32 %v354, %v355
        %v357 = vand.u32 %v356, 4294901760
        %358 = vmatpush1.msra.mxu0 %v357
        %359 = vmatprep.subr.mxu0 0.0
        %v360 = vand.u32 %v242, 4294901760
        %v361 = vsub.f32 %v242, %v360
        %v362 = vand.u32 %v361, 4294901760
        %v363 = vsub.f32 %v361, %v362
        %v364 = vand.u32 %v363, 4294901760
        %365 = vmatpush1.msra.mxu0 %v364
        %366 = vmatprep.subr.mxu0 0.0
        %v367 = vand.u32 %v243, 4294901760
        %v368 = vsub.f32 %v243, %v367
        %v369 = vand.u32 %v368, 4294901760
        %v370 = vsub.f32 %v368, %v369
        %v371 = vand.u32 %v370, 4294901760
        %372 = vmatpush1.msra.mxu0 %v371
        %373 = vmatprep.subr.mxu0 0.0
        %v374 = vand.u32 %v244, 4294901760
        %v375 = vsub.f32 %v244, %v374
        %v376 = vand.u32 %v375, 4294901760
        %v377 = vsub.f32 %v375, %v376
        %v378 = vand.u32 %v377, 4294901760
        %379 = vmatpush1.msra.mxu0 %v378
        %380 = vmatprep.subr.mxu0 0.0
        %381 = vmatpush1.msra.mxu0 0.0
        %382 = vmatprep.subr.mxu0 0.0
        %383 = vmatpush1.msra.mxu0 0.0
        %384 = vmatprep.subr.mxu0 0.0
        %385 = vmatpush1.msra.mxu0 0.0
        %386 = vmatprep.subr.mxu0 0.0
        %387 = vmatpush1.msra.mxu0 0.0
        %388 = vmatprep.subr.mxu0 0.0
        %389 = vmatpush1.msra.mxu0 0.0
        %390 = vmatprep.subr.mxu0 0.0
        %391 = vmatpush1.msra.mxu0 0.0
        %392 = vmatprep.subr.mxu0 0.0
        %393 = vmatpush1.msra.mxu0 0.0
        %394 = vmatprep.subr.mxu0 0.0
        %395 = vmatpush1.msra.mxu0 0.0
        %396 = vmatprep.subr.mxu0 0.0
        %397 = vmatpush1.msra.mxu0 0.0
        %398 = vmatprep.subr.mxu0 0.0
        %399 = vmatpush1.msra.mxu0 0.0
        %400 = vmatprep.subr.mxu0 0.0
        %401 = vmatpush1.msra.mxu0 0.0
        %402 = vmatprep.subr.mxu0 0.0
        %403 = vmatpush1.msra.mxu0 0.0
        %404 = vmatprep.subr.mxu0 0.0
        %405 = vmatpush1.msra.mxu0 0.0
        %406 = vmatprep.subr.mxu0 0.0
        %407 = vmatpush1.msra.mxu0 0.0
        %408 = vmatprep.subr.mxu0 0.0
        %409 = vmatpush1.msra.mxu0 0.0
        %410 = vmatprep.subr.mxu0 0.0
        %411 = vmatpush1.msra.mxu0 0.0
        %412 = vmatprep.subr.mxu0 0.0
        %413 = vmatpush1.msra.mxu0 0.0
        %414 = vmatprep.subr.mxu0 0.0
        %415 = vmatpush1.msra.mxu0 0.0
        %416 = vmatprep.subr.mxu0 0.0
        %417 = vmatpush1.msra.mxu0 0.0
        %418 = vmatprep.subr.mxu0 0.0
        %419 = vmatpush1.msra.mxu0 0.0
        %420 = vmatprep.subr.mxu0 0.0
        %421 = vmatpush1.msra.mxu0 0.0
        %422 = vmatprep.subr.mxu0 0.0
        %423 = vmatpush1.msra.mxu0 0.0
        %424 = vmatprep.subr.mxu0 0.0
        %425 = vmatpush1.msra.mxu0 0.0
        %426 = vmatprep.subr.mxu0 0.0
        %427 = vmatpush1.msra.mxu0 0.0
        %428 = vmatprep.subr.mxu0 0.0
        %429 = vmatpush1.msra.mxu0 0.0
        %430 = vmatprep.mubr.f32.mxu0 0.0
        %v431 = vand.u32 %v247, 4294901760
        %432 = vmatmul.mubr.f32.gmra.mrb[0].mxu0 %v431
        %v433 = vpop.f32.mrb[0].mxu0
        %v434 = vadd.f32 %v328, %v433
        %v435 = vpop.f32.mrb[0].mxu0
        %436 = vdwg.mxu0
        %437 = vmatprep.subr.mxu0 0.0
        %v438 = vand.u32 %v238, 4294901760
        %v439 = vsub.f32 %v238, %v438
        %440 = vmatpush1.msra.mxu0 %v439
        %441 = vmatprep.subr.mxu0 0.0
        %v442 = vand.u32 %v239, 4294901760
        %v443 = vsub.f32 %v239, %v442
        %444 = vmatpush1.msra.mxu0 %v443
        %445 = vmatprep.subr.mxu0 0.0
        %v446 = vand.u32 %v240, 4294901760
        %v447 = vsub.f32 %v240, %v446
        %448 = vmatpush1.msra.mxu0 %v447
        %449 = vmatprep.subr.mxu0 0.0
        %v450 = vand.u32 %v241, 4294901760
        %v451 = vsub.f32 %v241, %v450
        %452 = vmatpush1.msra.mxu0 %v451
        %453 = vmatprep.subr.mxu0 0.0
        %v454 = vand.u32 %v242, 4294901760
        %v455 = vsub.f32 %v242, %v454
        %456 = vmatpush1.msra.mxu0 %v455
        %457 = vmatprep.subr.mxu0 0.0
        %v458 = vand.u32 %v243, 4294901760
        %v459 = vsub.f32 %v243, %v458
        %460 = vmatpush1.msra.mxu0 %v459
        %461 = vmatprep.subr.mxu0 0.0
        %v462 = vand.u32 %v244, 4294901760
        %v463 = vsub.f32 %v244, %v462
        %464 = vmatpush1.msra.mxu0 %v463
        %465 = vmatprep.subr.mxu0 0.0
        %466 = vmatpush1.msra.mxu0 0.0
        %467 = vmatprep.subr.mxu0 0.0
        %468 = vmatpush1.msra.mxu0 0.0
        %469 = vmatprep.subr.mxu0 0.0
        %470 = vmatpush1.msra.mxu0 0.0
        %471 = vmatprep.subr.mxu0 0.0
        %472 = vmatpush1.msra.mxu0 0.0
        %473 = vmatprep.subr.mxu0 0.0
        %474 = vmatpush1.msra.mxu0 0.0
        %475 = vmatprep.subr.mxu0 0.0
        %476 = vmatpush1.msra.mxu0 0.0
        %477 = vmatprep.subr.mxu0 0.0
        %478 = vmatpush1.msra.mxu0 0.0
        %479 = vmatprep.subr.mxu0 0.0
        %480 = vmatpush1.msra.mxu0 0.0
        %481 = vmatprep.subr.mxu0 0.0
        %482 = vmatpush1.msra.mxu0 0.0
        %483 = vmatprep.subr.mxu0 0.0
        %484 = vmatpush1.msra.mxu0 0.0
        %485 = vmatprep.subr.mxu0 0.0
        %486 = vmatpush1.msra.mxu0 0.0
        %487 = vmatprep.subr.mxu0 0.0
        %488 = vmatpush1.msra.mxu0 0.0
        %489 = vmatprep.subr.mxu0 0.0
        %490 = vmatpush1.msra.mxu0 0.0
        %491 = vmatprep.subr.mxu0 0.0
        %492 = vmatpush1.msra.mxu0 0.0
        %493 = vmatprep.subr.mxu0 0.0
        %494 = vmatpush1.msra.mxu0 0.0
        %495 = vmatprep.subr.mxu0 0.0
        %496 = vmatpush1.msra.mxu0 0.0
        %497 = vmatprep.subr.mxu0 0.0
        %498 = vmatpush1.msra.mxu0 0.0
        %499 = vmatprep.subr.mxu0 0.0
        %500 = vmatpush1.msra.mxu0 0.0
        %501 = vmatprep.subr.mxu0 0.0
        %502 = vmatpush1.msra.mxu0 0.0
        %503 = vmatprep.subr.mxu0 0.0
        %504 = vmatpush1.msra.mxu0 0.0
        %505 = vmatprep.subr.mxu0 0.0
        %506 = vmatpush1.msra.mxu0 0.0
        %507 = vmatprep.subr.mxu0 0.0
        %508 = vmatpush1.msra.mxu0 0.0
        %509 = vmatprep.subr.mxu0 0.0
        %510 = vmatpush1.msra.mxu0 0.0
        %511 = vmatprep.subr.mxu0 0.0
        %512 = vmatpush1.msra.mxu0 0.0
        %513 = vmatprep.subr.mxu0 0.0
        %514 = vmatpush1.msra.mxu0 0.0
        %515 = vmatprep.mubr.f32.mxu0 0.0
        %v516 = vand.u32 %v247, 4294901760
        %v517 = vsub.f32 %v247, %v516
        %518 = vmatmul.mubr.f32.gmra.mrb[0].mxu0 %v517
        %v519 = vpop.f32.mrb[0].mxu0
        %v520 = vadd.f32 %v434, %v519
        %v521 = vpop.f32.mrb[0].mxu0
        %522 = vdwg.mxu0
        %523 = vmatprep.subr.mxu0 0.0
        %v524 = vand.u32 %v238, 4294901760
        %525 = vmatpush1.msra.mxu0 %v524
        %526 = vmatprep.subr.mxu0 0.0
        %v527 = vand.u32 %v239, 4294901760
        %528 = vmatpush1.msra.mxu0 %v527
        %529 = vmatprep.subr.mxu0 0.0
        %v530 = vand.u32 %v240, 4294901760
        %531 = vmatpush1.msra.mxu0 %v530
        %532 = vmatprep.subr.mxu0 0.0
        %v533 = vand.u32 %v241, 4294901760
        %534 = vmatpush1.msra.mxu0 %v533
        %535 = vmatprep.subr.mxu0 0.0
        %v536 = vand.u32 %v242, 4294901760
        %537 = vmatpush1.msra.mxu0 %v536
        %538 = vmatprep.subr.mxu0 0.0
        %v539 = vand.u32 %v243, 4294901760
        %540 = vmatpush1.msra.mxu0 %v539
        %541 = vmatprep.subr.mxu0 0.0
        %v542 = vand.u32 %v244, 4294901760
        %543 = vmatpush1.msra.mxu0 %v542
        %544 = vmatprep.subr.mxu0 0.0
        %545 = vmatpush1.msra.mxu0 0.0
        %546 = vmatprep.subr.mxu0 0.0
        %547 = vmatpush1.msra.mxu0 0.0
        %548 = vmatprep.subr.mxu0 0.0
        %549 = vmatpush1.msra.mxu0 0.0
        %550 = vmatprep.subr.mxu0 0.0
        %551 = vmatpush1.msra.mxu0 0.0
        %552 = vmatprep.subr.mxu0 0.0
        %553 = vmatpush1.msra.mxu0 0.0
        %554 = vmatprep.subr.mxu0 0.0
        %555 = vmatpush1.msra.mxu0 0.0
        %556 = vmatprep.subr.mxu0 0.0
        %557 = vmatpush1.msra.mxu0 0.0
        %558 = vmatprep.subr.mxu0 0.0
        %559 = vmatpush1.msra.mxu0 0.0
        %560 = vmatprep.subr.mxu0 0.0
        %561 = vmatpush1.msra.mxu0 0.0
        %562 = vmatprep.subr.mxu0 0.0
        %563 = vmatpush1.msra.mxu0 0.0
        %564 = vmatprep.subr.mxu0 0.0
        %565 = vmatpush1.msra.mxu0 0.0
        %566 = vmatprep.subr.mxu0 0.0
        %567 = vmatpush1.msra.mxu0 0.0
        %568 = vmatprep.subr.mxu0 0.0
        %569 = vmatpush1.msra.mxu0 0.0
        %570 = vmatprep.subr.mxu0 0.0
        %571 = vmatpush1.msra.mxu0 0.0
        %572 = vmatprep.subr.mxu0 0.0
        %573 = vmatpush1.msra.mxu0 0.0
        %574 = vmatprep.subr.mxu0 0.0
        %575 = vmatpush1.msra.mxu0 0.0
        %576 = vmatprep.subr.mxu0 0.0
        %577 = vmatpush1.msra.mxu0 0.0
        %578 = vmatprep.subr.mxu0 0.0
        %579 = vmatpush1.msra.mxu0 0.0
        %580 = vmatprep.subr.mxu0 0.0
        %581 = vmatpush1.msra.mxu0 0.0
        %582 = vmatprep.subr.mxu0 0.0
        %583 = vmatpush1.msra.mxu0 0.0
        %584 = vmatprep.subr.mxu0 0.0
        %585 = vmatpush1.msra.mxu0 0.0
        %586 = vmatprep.subr.mxu0 0.0
        %587 = vmatpush1.msra.mxu0 0.0
        %588 = vmatprep.subr.mxu0 0.0
        %589 = vmatpush1.msra.mxu0 0.0
        %590 = vmatprep.subr.mxu0 0.0
        %591 = vmatpush1.msra.mxu0 0.0
        %592 = vmatprep.subr.mxu0 0.0
        %593 = vmatpush1.msra.mxu0 0.0
        %594 = vmatprep.mubr.f32.mxu0 0.0
        %v595 = vand.u32 %v247, 4294901760
        %v596 = vsub.f32 %v247, %v595
        %v597 = vand.u32 %v596, 4294901760
        %598 = vmatmul.mubr.f32.gmra.mrb[0].mxu0 %v597
        %v599 = vpop.f32.mrb[0].mxu0
        %v600 = vadd.f32 %v520, %v599
        %v601 = vpop.f32.mrb[0].mxu0
        %602 = vdwg.mxu0
        %603 = vmatprep.subr.mxu0 0.0
        %v604 = vand.u32 %v238, 4294901760
        %v605 = vsub.f32 %v238, %v604
        %v606 = vand.u32 %v605, 4294901760
        %607 = vmatpush1.msra.mxu0 %v606
        %608 = vmatprep.subr.mxu0 0.0
        %v609 = vand.u32 %v239, 4294901760
        %v610 = vsub.f32 %v239, %v609
        %v611 = vand.u32 %v610, 4294901760
        %612 = vmatpush1.msra.mxu0 %v611
        %613 = vmatprep.subr.mxu0 0.0
        %v614 = vand.u32 %v240, 4294901760
        %v615 = vsub.f32 %v240, %v614
        %v616 = vand.u32 %v615, 4294901760
        %617 = vmatpush1.msra.mxu0 %v616
        %618 = vmatprep.subr.mxu0 0.0
        %v619 = vand.u32 %v241, 4294901760
        %v620 = vsub.f32 %v241, %v619
        %v621 = vand.u32 %v620, 4294901760
        %622 = vmatpush1.msra.mxu0 %v621
        %623 = vmatprep.subr.mxu0 0.0
        %v624 = vand.u32 %v242, 4294901760
        %v625 = vsub.f32 %v242, %v624
        %v626 = vand.u32 %v625, 4294901760
        %627 = vmatpush1.msra.mxu0 %v626
        %628 = vmatprep.subr.mxu0 0.0
        %v629 = vand.u32 %v243, 4294901760
        %v630 = vsub.f32 %v243, %v629
        %v631 = vand.u32 %v630, 4294901760
        %632 = vmatpush1.msra.mxu0 %v631
        %633 = vmatprep.subr.mxu0 0.0
        %v634 = vand.u32 %v244, 4294901760
        %v635 = vsub.f32 %v244, %v634
        %v636 = vand.u32 %v635, 4294901760
        %637 = vmatpush1.msra.mxu0 %v636
        %638 = vmatprep.subr.mxu0 0.0
        %639 = vmatpush1.msra.mxu0 0.0
        %640 = vmatprep.subr.mxu0 0.0
        %641 = vmatpush1.msra.mxu0 0.0
        %642 = vmatprep.subr.mxu0 0.0
        %643 = vmatpush1.msra.mxu0 0.0
        %644 = vmatprep.subr.mxu0 0.0
        %645 = vmatpush1.msra.mxu0 0.0
        %646 = vmatprep.subr.mxu0 0.0
        %647 = vmatpush1.msra.mxu0 0.0
        %648 = vmatprep.subr.mxu0 0.0
        %649 = vmatpush1.msra.mxu0 0.0
        %650 = vmatprep.subr.mxu0 0.0
        %651 = vmatpush1.msra.mxu0 0.0
        %652 = vmatprep.subr.mxu0 0.0
        %653 = vmatpush1.msra.mxu0 0.0
        %654 = vmatprep.subr.mxu0 0.0
        %655 = vmatpush1.msra.mxu0 0.0
        %656 = vmatprep.subr.mxu0 0.0
        %657 = vmatpush1.msra.mxu0 0.0
        %658 = vmatprep.subr.mxu0 0.0
        %659 = vmatpush1.msra.mxu0 0.0
        %660 = vmatprep.subr.mxu0 0.0
        %661 = vmatpush1.msra.mxu0 0.0
        %662 = vmatprep.subr.mxu0 0.0
        %663 = vmatpush1.msra.mxu0 0.0
        %664 = vmatprep.subr.mxu0 0.0
        %665 = vmatpush1.msra.mxu0 0.0
        %666 = vmatprep.subr.mxu0 0.0
        %667 = vmatpush1.msra.mxu0 0.0
        %668 = vmatprep.subr.mxu0 0.0
        %669 = vmatpush1.msra.mxu0 0.0
        %670 = vmatprep.subr.mxu0 0.0
        %671 = vmatpush1.msra.mxu0 0.0
        %672 = vmatprep.subr.mxu0 0.0
        %673 = vmatpush1.msra.mxu0 0.0
        %674 = vmatprep.subr.mxu0 0.0
        %675 = vmatpush1.msra.mxu0 0.0
        %676 = vmatprep.subr.mxu0 0.0
        %677 = vmatpush1.msra.mxu0 0.0
        %678 = vmatprep.subr.mxu0 0.0
        %679 = vmatpush1.msra.mxu0 0.0
        %680 = vmatprep.subr.mxu0 0.0
        %681 = vmatpush1.msra.mxu0 0.0
        %682 = vmatprep.subr.mxu0 0.0
        %683 = vmatpush1.msra.mxu0 0.0
        %684 = vmatprep.subr.mxu0 0.0
        %685 = vmatpush1.msra.mxu0 0.0
        %686 = vmatprep.subr.mxu0 0.0
        %687 = vmatpush1.msra.mxu0 0.0
        %688 = vmatprep.mubr.f32.mxu0 0.0
        %v689 = vand.u32 %v247, 4294901760
        %690 = vmatmul.mubr.f32.gmra.mrb[0].mxu0 %v689
        %v691 = vpop.f32.mrb[0].mxu0
        %v692 = vadd.f32 %v600, %v691
        %v693 = vpop.f32.mrb[0].mxu0
        %694 = vdwg.mxu0
        %695 = vmatprep.subr.mxu0 0.0
        %v696 = vand.u32 %v238, 4294901760
        %697 = vmatpush1.msra.mxu0 %v696
        %698 = vmatprep.subr.mxu0 0.0
        %v699 = vand.u32 %v239, 4294901760
        %700 = vmatpush1.msra.mxu0 %v699
        %701 = vmatprep.subr.mxu0 0.0
        %v702 = vand.u32 %v240, 4294901760
        %703 = vmatpush1.msra.mxu0 %v702
        %704 = vmatprep.subr.mxu0 0.0
        %v705 = vand.u32 %v241, 4294901760
        %706 = vmatpush1.msra.mxu0 %v705
        %707 = vmatprep.subr.mxu0 0.0
        %v708 = vand.u32 %v242, 4294901760
        %709 = vmatpush1.msra.mxu0 %v708
        %710 = vmatprep.subr.mxu0 0.0
        %v711 = vand.u32 %v243, 4294901760
        %712 = vmatpush1.msra.mxu0 %v711
        %713 = vmatprep.subr.mxu0 0.0
        %v714 = vand.u32 %v244, 4294901760
        %715 = vmatpush1.msra.mxu0 %v714
        %716 = vmatprep.subr.mxu0 0.0
        %717 = vmatpush1.msra.mxu0 0.0
        %718 = vmatprep.subr.mxu0 0.0
        %719 = vmatpush1.msra.mxu0 0.0
        %720 = vmatprep.subr.mxu0 0.0
        %721 = vmatpush1.msra.mxu0 0.0
        %722 = vmatprep.subr.mxu0 0.0
        %723 = vmatpush1.msra.mxu0 0.0
        %724 = vmatprep.subr.mxu0 0.0
        %725 = vmatpush1.msra.mxu0 0.0
        %726 = vmatprep.subr.mxu0 0.0
        %727 = vmatpush1.msra.mxu0 0.0
        %728 = vmatprep.subr.mxu0 0.0
        %729 = vmatpush1.msra.mxu0 0.0
        %730 = vmatprep.subr.mxu0 0.0
        %731 = vmatpush1.msra.mxu0 0.0
        %732 = vmatprep.subr.mxu0 0.0
        %733 = vmatpush1.msra.mxu0 0.0
        %734 = vmatprep.subr.mxu0 0.0
        %735 = vmatpush1.msra.mxu0 0.0
        %736 = vmatprep.subr.mxu0 0.0
        %737 = vmatpush1.msra.mxu0 0.0
        %738 = vmatprep.subr.mxu0 0.0
        %739 = vmatpush1.msra.mxu0 0.0
        %740 = vmatprep.subr.mxu0 0.0
        %741 = vmatpush1.msra.mxu0 0.0
        %742 = vmatprep.subr.mxu0 0.0
        %743 = vmatpush1.msra.mxu0 0.0
        %744 = vmatprep.subr.mxu0 0.0
        %745 = vmatpush1.msra.mxu0 0.0
        %746 = vmatprep.subr.mxu0 0.0
        %747 = vmatpush1.msra.mxu0 0.0
        %748 = vmatprep.subr.mxu0 0.0
        %749 = vmatpush1.msra.mxu0 0.0
        %750 = vmatprep.subr.mxu0 0.0
        %751 = vmatpush1.msra.mxu0 0.0
        %752 = vmatprep.subr.mxu0 0.0
        %753 = vmatpush1.msra.mxu0 0.0
        %754 = vmatprep.subr.mxu0 0.0
        %755 = vmatpush1.msra.mxu0 0.0
        %756 = vmatprep.subr.mxu0 0.0
        %757 = vmatpush1.msra.mxu0 0.0
        %758 = vmatprep.subr.mxu0 0.0
        %759 = vmatpush1.msra.mxu0 0.0
        %760 = vmatprep.subr.mxu0 0.0
        %761 = vmatpush1.msra.mxu0 0.0
        %762 = vmatprep.subr.mxu0 0.0
        %763 = vmatpush1.msra.mxu0 0.0
        %764 = vmatprep.subr.mxu0 0.0
        %765 = vmatpush1.msra.mxu0 0.0
        %766 = vmatprep.mubr.f32.mxu0 0.0
        %v767 = vand.u32 %v247, 4294901760
        %768 = vmatmul.mubr.f32.gmra.mrb[0].mxu0 %v767
        %v769 = vpop.f32.mrb[0].mxu0
        %v770 = vadd.f32 %v692, %v769
        %v771 = vpop.f32.mrb[0].mxu0
        %772 = vdwg.mxu0
        %v773 = vadd.f32 %v236, %v770
        %774 = vst [vmem:[#allocation2] sm:$0xff] %v773
        %v775 = vld [vmem:[#allocation2] sm:$0xff]
        %776 = vst [vmem:[%s193] sm:$0xff] %v775
        %s777 = sand.u32 %s95, 1
        %s778 = scalar_lea.sflag [#allocation8], %s777
        %s779 = sand.u32 %s95, 1
        %s780 = smul.addr %s779, 8
        %s781 = scalar_lea.vmem [#allocation9], %s780
        // Predicated region
        $region37: #{_fused_embedding_bag_call.1} parent=27 // pred_check
          %p782 = pneg %p105
        $region38: #{_fused_embedding_bag_call.1} parent=27 // pred_check_branch
          %784 = sbr.rel (%p782) target = $region40
        $region39: #{_fused_embedding_bag_call.1} parent=27 // pred_region
          %s785 = sld [smem:[#allocation4 + %s31]]
          %s787 = ssub.s32 128, 128
          %788 = vsyncadd %s778, %s787
          %s789 = smul.addr %s785, 128
          %s790 = scalar_lea.hbm %s4, %s789
          %s792 = sshll.u32 %s781, 4
          %s793 = int_to_ptr.vmem [resolvable:$true] %s792
          %795 = dma.vmem_to_hbm [thread:$0]  %s793, 128, %s790, %s778
        $region40: #{_fused_embedding_bag_call.1} parent=27 // pred_fallthru
          _
      $region28: #{_fused_embedding_bag_call.1} parent=5 // pred_fallthru
        _
      %p796 = scmp.le.s32.totalorder 2, %s26
      // Predicated region
      $region41: #{_fused_embedding_bag_call.1} parent=5 // pred_check
        %p797 = pneg %p796
      $region42: #{_fused_embedding_bag_call.1} parent=5 // pred_check_branch
        %799 = sbr.rel (%p797) target = $region44
      $region43: #{_fused_embedding_bag_call.1} parent=5 // pred_region
        %s800 = ssub.s32 %s26, 2
        // Predicated region
        $region45: #{_fused_embedding_bag_call.1} parent=43 // pred_check
          %p801 = pneg %p111
        $region46: #{_fused_embedding_bag_call.1} parent=43 // pred_check_branch
          %803 = sbr.rel (%p801) target = $region48
        $region47: #{_fused_embedding_bag_call.1} parent=43 // pred_region
          %s804 = sand.u32 %s96, 1
          %s805 = scalar_lea.sflag [#allocation8], %s804
          %s806 = sand.u32 %s96, 1
          %s807 = smul.addr %s806, 8
          %s808 = scalar_lea.vmem [#allocation9], %s807
          %809 = dma.done %s805, 128
        $region48: #{_fused_embedding_bag_call.1} parent=43 // pred_fallthru
          _
      $region44: #{_fused_embedding_bag_call.1} parent=5 // pred_fallthru
        _
    $region6: #{_fused_embedding_bag_call.1} parent=1 // loop_footer
      %s30 = sadd.s32 1, %s26
    $region7: #{_fused_embedding_bag_call.1} parent=1 // loop_footer_branch
      %25 = sbr.rel target = $region3
    $region8: #{_fused_embedding_bag_call.1} parent=1 // loop_exit
      _
    %810 = vsyncpa [#allocation7], 1
    %s811 = scalar_lea.sflag [#allocation7], 1
    %812 = vsyncpa %s811, 1
    %813 = vsyncpa [#allocation8], 1
    %s814 = scalar_lea.sflag [#allocation8], 1
    %815 = vsyncpa %s814, 1

</llo_original>
